<compile_context>
chip_gen: v7x
topology: tpu7x:2x2x1
jax: 0.10.0
libtpu: 0.0.40
codegen_flags: <defaults>
</compile_context>

<pallas_src>
import functools

import jax
import jax.numpy as jnp
from jax import lax
from jax.experimental import pallas as pl
from jax.experimental.pallas import tpu as pltpu


def _round_up(n, m):
    return ((n + m - 1) // m) * m


def _pick_tile_d(D, H, W, C, tile_q, budget_bytes):
    """Largest z-slab size (divisor of D) whose VMEM footprint fits the budget.

    The feats block lane dim is TILE_D*H*W, which must be a multiple of 128 unless
    it equals the full V extent (TILE_D == D)."""
    hw = H * W
    valid = [d for d in range(1, D + 1)
             if D % d == 0 and (d == D or (d * hw) % 128 == 0)]

    def cost(d):
        tv = d * hw
        m_bytes = 4 * tv * tile_q            # M weight matrix (built in-kernel)
        feats_bytes = 2 * 4 * C * tv         # double-buffered feats block
        szy_bytes = 4 * d * H * tile_q       # Szy intermediate
        out_bytes = 2 * 4 * C * tile_q       # resident/double-buffered output tile
        return m_bytes + feats_bytes + szy_bytes + out_bytes

    fitting = [d for d in valid if cost(d) <= budget_bytes]
    return max(fitting) if fitting else min(valid)


def _trilerp_kernel(grid_ref, feats_ref, out_ref, *, D, H, W, TILE_D, mxu_dtype):
    # grid_ref : (3, TQ)           f32  -- normalized coords in [-1, 1]; rows = x, y, z
    # feats_ref: (C, TILE_D*H*W)   f32  -- z-slab k of the flattened volume
    # out_ref  : (C, TQ)           f32  -- accumulated over the z-slab (last) grid axis
    k = pl.program_id(2)
    z_base = k * TILE_D

    g = jnp.clip(grid_ref[...], -1.0, 1.0)
    g = (g + 1.0) * 0.5                       # -> [0, 1]
    x = g[0:1, :] * (W - 1.0)                 # (1, TQ)
    y = g[1:2, :] * (H - 1.0)
    z = g[2:3, :] * (D - 1.0)

    x0f = jnp.floor(x)
    y0f = jnp.floor(y)
    z0f = jnp.floor(z)
    u = x - x0f
    v = y - y0f
    w = z - z0f

    def clampi(a, hi):
        return jnp.clip(a.astype(jnp.int32), 0, hi)

    ix0, ix1 = clampi(x0f, W - 1), clampi(x0f + 1.0, W - 1)
    iy0, iy1 = clampi(y0f, H - 1), clampi(y0f + 1.0, H - 1)
    iz0, iz1 = clampi(z0f, D - 1), clampi(z0f + 1.0, D - 1)

    def axis_weights(n, base, i0, i1, frac):
        # S[i, q] = (1-frac_q)*[base+i == i0_q] + frac_q*[base+i == i1_q]
        # Duplicate clamped corners correctly sum their weights (matches PyTorch).
        iota = lax.broadcasted_iota(jnp.int32, (n, 1), 0) + base          # (n, 1)
        return (jnp.where(iota == i0, 1.0 - frac, 0.0)
                + jnp.where(iota == i1, frac, 0.0))                       # (n, TQ)

    Sx = axis_weights(W, 0, ix0, ix1, u)             # (W, TQ)
    Sy = axis_weights(H, 0, iy0, iy1, v)             # (H, TQ)
    Sz = axis_weights(TILE_D, z_base, iz0, iz1, w)   # (TILE_D, TQ)

    # Separable outer product -> trilinear weight matrix for this z-slab.
    Szy = Sz[:, None, :] * Sy[None, :, :]                                 # (TILE_D, H, TQ)
    M = (Szy[:, :, None, :] * Sx[None, None, :, :]).reshape(TILE_D * H * W, -1)

    part = jnp.dot(feats_ref[...].astype(mxu_dtype), M.astype(mxu_dtype),
                   preferred_element_type=jnp.float32)

    @pl.when(k == 0)
    def _():
        out_ref[...] = jnp.zeros_like(out_ref)

    out_ref[...] += part


def trilinear_interpolation(input_feats, sampling_grid, *, tile_q=512,
                            vmem_budget_bytes=20 * 1024 * 1024,
                            mxu_dtype=jnp.float32):
    """input_feats: [B, C, D, H, W]; sampling_grid: [B, Hg, Wg, 3] in [-1, 1].
    Returns [B, C, Hg, Wg] float32 (matches the PyTorch module's forward).

    mxu_dtype=jnp.bfloat16 feeds the MXU in bf16 (faster on v6e/v7x, ~1e-3 rel error)."""
    B, C, D, H, W = input_feats.shape
    _, Hg, Wg, _ = sampling_grid.shape
    Q = Hg * Wg
    V = D * H * W
    HW = H * W

    # Lane-dense query tiles: multiple of 128, pad Q up to a multiple of the tile.
    tq = _round_up(max(128, min(tile_q, _round_up(Q, 128))), 128)
    Qp = _round_up(Q, tq)
    num_q = Qp // tq

    tile_d = _pick_tile_d(D, H, W, C, tq, vmem_budget_bytes)
    tv = tile_d * HW
    num_k = D // tile_d

    feats = input_feats.reshape(B, C, V).astype(jnp.float32)
    grid = sampling_grid.reshape(B, Q, 3).transpose(0, 2, 1).astype(jnp.float32)  # [B,3,Q]
    if Qp != Q:
        grid = jnp.pad(grid, ((0, 0), (0, 0), (0, Qp - Q)))   # padded queries discarded later

    kernel = functools.partial(_trilerp_kernel, D=D, H=H, W=W,
                               TILE_D=tile_d, mxu_dtype=mxu_dtype)

    out = pl.pallas_call(
        kernel,
        out_shape=jax.ShapeDtypeStruct((B, C, Qp), jnp.float32),
        grid_spec=pltpu.PrefetchScalarGridSpec(
            num_scalar_prefetch=0,
            grid=(B, num_q, num_k),          # reduction (z-slab) axis last
            in_specs=[
                pl.BlockSpec((pl.Squeezed(), 3, tq), lambda b, q, k: (b, 0, q)),
                pl.BlockSpec((pl.Squeezed(), C, tv), lambda b, q, k: (b, 0, k)),
            ],
            out_specs=pl.BlockSpec((pl.Squeezed(), C, tq), lambda b, q, k: (b, 0, q)),
        ),
        compiler_params=pltpu.CompilerParams(
            dimension_semantics=("parallel", "parallel", "arbitrary"),
            vmem_limit_bytes=48 * 1024 * 1024,
        ),
    )(grid, feats)

    return out[:, :, :Q].reshape(B, C, Hg, Wg)


def _reference(input_feats, sampling_grid):
    """Pure-JAX reference with the exact PyTorch semantics (border clamp, floor)."""
    B, C, D, H, W = input_feats.shape
    g = jnp.clip(sampling_grid, -1.0, 1.0)
    g = (g + 1.0) / 2.0
    g = g * jnp.array([W - 1.0, H - 1.0, D - 1.0], jnp.float32)
    x, y, z = g[..., 0], g[..., 1], g[..., 2]
    x0, y0, z0 = jnp.floor(x), jnp.floor(y), jnp.floor(z)
    u, v, w = x - x0, y - y0, z - z0

    def gather_b(feats_b, iz, iy, ix):  # feats_b [C,D,H,W], idx [Hg,Wg]
        return feats_b[:, iz, iy, ix]   # -> [C,Hg,Wg]

    def samp(xf, yf, zf):
        ix = jnp.clip(xf.astype(jnp.int32), 0, W - 1)
        iy = jnp.clip(yf.astype(jnp.int32), 0, H - 1)
        iz = jnp.clip(zf.astype(jnp.int32), 0, D - 1)
        return jax.vmap(gather_b)(input_feats, iz, iy, ix)  # [B,C,Hg,Wg]

    ue, ve, we = u[:, None], v[:, None], w[:, None]
    out = ((1 - ue) * (1 - ve) * (1 - we) * samp(x0, y0, z0)
           + (1 - ue) * (1 - ve) * we * samp(x0, y0, z0 + 1)
           + (1 - ue) * ve * (1 - we) * samp(x0, y0 + 1, z0)
           + (1 - ue) * ve * we * samp(x0, y0 + 1, z0 + 1)
           + ue * (1 - ve) * (1 - we) * samp(x0 + 1, y0, z0)
           + ue * (1 - ve) * we * samp(x0 + 1, y0, z0 + 1)
           + ue * ve * (1 - we) * samp(x0 + 1, y0 + 1, z0)
           + ue * ve * we * samp(x0 + 1, y0 + 1, z0 + 1))
    return out


if __name__ == "__main__":
    key = jax.random.PRNGKey(0)
    k1, k2, k3, k4 = jax.random.split(key, 4)

    # --- test 1: small toy shapes (Q=64 padded up to a lane-dense 128) ---
    B, C, D, H, W = 2, 4, 8, 8, 8
    Hg, Wg = 8, 8
    feats1 = jax.random.normal(k1, (B, C, D, H, W), dtype=jnp.float32)
    # slightly outside [-1,1] to exercise the clamping path
    grid1 = jax.random.uniform(k2, (B, Hg, Wg, 3), dtype=jnp.float32,
                               minval=-1.2, maxval=1.2)
    out1 = jax.block_until_ready(trilinear_interpolation(feats1, grid1))
    ref1 = _reference(feats1, grid1)
    assert out1.shape == (B, C, Hg, Wg)
    assert jnp.allclose(out1, ref1, atol=1e-5, rtol=1e-5), "test1: mismatch vs reference"

    # --- test 2: force query tiling + z-slab reduction tiling (accumulator path) ---
    B2, C2, D2, H2, W2 = 1, 4, 8, 8, 8
    Hg2, Wg2 = 16, 16
    feats2 = jax.random.normal(k3, (B2, C2, D2, H2, W2), dtype=jnp.float32)
    grid2 = jax.random.uniform(k4, (B2, Hg2, Wg2, 3), dtype=jnp.float32,
                               minval=-1.2, maxval=1.2)
    out2 = jax.block_until_ready(
        trilinear_interpolation(feats2, grid2, tile_q=128,
                                vmem_budget_bytes=200_000))  # tile_d=4 -> 2 reduction steps
    ref2 = _reference(feats2, grid2)
    assert out2.shape == (B2, C2, Hg2, Wg2)
    assert jnp.allclose(out2, ref2, atol=1e-5, rtol=1e-5), "test2: mismatch vs reference"

    print("KERNEL_OK")
</pallas_src>

<mosaic_0001>
module attributes {stable_mosaic.version = 11 : i64} {
  func.func @_trilerp_kernel(%arg0: i32, %arg1: i32, %arg2: i32, %arg3: memref<1x3x128xf32, #tpu.memory_space<vmem>>, %arg4: memref<1x4x512xf32, #tpu.memory_space<vmem>>, %arg5: memref<1x4x128xf32, #tpu.memory_space<vmem>>) attributes {dimension_semantics = [#tpu.dimension_semantics<parallel>, #tpu.dimension_semantics<parallel>, #tpu.dimension_semantics<arbitrary>], iteration_bounds = array<i64: 2, 1, 1>, scalar_prefetch = 0 : i64, scratch_operands = 0 : i64, tpu.core_type = #tpu.core_type<tc>, window_params = [{transform_indices = @transform_0, window_bounds = array<i64: 1, 3, 128>}, {transform_indices = @transform_1, window_bounds = array<i64: 1, 4, 512>}, {transform_indices = @transform_2, window_bounds = array<i64: 1, 4, 128>}]} {
    %c8_i32 = arith.constant 8 : i32
    %0 = arith.muli %arg2, %c8_i32 : i32
    %c0 = arith.constant 0 : index
    %c0_0 = arith.constant 0 : index
    %c0_1 = arith.constant 0 : index
    %1 = vector.load %arg3[%c0, %c0_0, %c0_1] : memref<1x3x128xf32, #tpu.memory_space<vmem>>, vector<1x3x128xf32>
    %2 = vector.shape_cast %1 : vector<1x3x128xf32> to vector<3x128xf32>
    %cst = arith.constant -1.000000e+00 : f32
    %cst_2 = arith.constant 1.000000e+00 : f32
    %3 = vector.broadcast %cst : f32 to vector<3x128xf32>
    %4 = arith.maximumf %3, %2 : vector<3x128xf32>
    %5 = vector.broadcast %cst_2 : f32 to vector<3x128xf32>
    %6 = arith.minimumf %5, %4 : vector<3x128xf32>
    %cst_3 = arith.constant 1.000000e+00 : f32
    %7 = vector.broadcast %cst_3 : f32 to vector<3x128xf32>
    %8 = arith.addf %6, %7 : vector<3x128xf32>
    %cst_4 = arith.constant 5.000000e-01 : f32
    %9 = vector.broadcast %cst_4 : f32 to vector<3x128xf32>
    %10 = arith.mulf %8, %9 : vector<3x128xf32>
    %11 = vector.extract_strided_slice %10 {offsets = [0, 0], sizes = [1, 128], strides = [1, 1]} : vector<3x128xf32> to vector<1x128xf32>
    %cst_5 = arith.constant 7.000000e+00 : f32
    %12 = vector.broadcast %cst_5 : f32 to vector<1x128xf32>
    %13 = arith.mulf %11, %12 : vector<1x128xf32>
    %14 = vector.extract_strided_slice %10 {offsets = [1, 0], sizes = [1, 128], strides = [1, 1]} : vector<3x128xf32> to vector<1x128xf32>
    %cst_6 = arith.constant 7.000000e+00 : f32
    %15 = vector.broadcast %cst_6 : f32 to vector<1x128xf32>
    %16 = arith.mulf %14, %15 : vector<1x128xf32>
    %17 = vector.extract_strided_slice %10 {offsets = [2, 0], sizes = [1, 128], strides = [1, 1]} : vector<3x128xf32> to vector<1x128xf32>
    %cst_7 = arith.constant 7.000000e+00 : f32
    %18 = vector.broadcast %cst_7 : f32 to vector<1x128xf32>
    %19 = arith.mulf %17, %18 : vector<1x128xf32>
    %20 = math.floor %13 : vector<1x128xf32>
    %21 = math.floor %16 : vector<1x128xf32>
    %22 = math.floor %19 : vector<1x128xf32>
    %23 = arith.subf %13, %20 : vector<1x128xf32>
    %24 = arith.subf %16, %21 : vector<1x128xf32>
    %25 = arith.subf %19, %22 : vector<1x128xf32>
    %26 = arith.fptosi %20 : vector<1x128xf32> to vector<1x128xi32>
    %c0_i32 = arith.constant 0 : i32
    %c7_i32 = arith.constant 7 : i32
    %27 = vector.broadcast %c0_i32 : i32 to vector<1x128xi32>
    %28 = arith.maxsi %27, %26 : vector<1x128xi32>
    %29 = vector.broadcast %c7_i32 : i32 to vector<1x128xi32>
    %30 = arith.minsi %29, %28 : vector<1x128xi32>
    %cst_8 = arith.constant 1.000000e+00 : f32
    %31 = vector.broadcast %cst_8 : f32 to vector<1x128xf32>
    %32 = arith.addf %20, %31 : vector<1x128xf32>
    %33 = arith.fptosi %32 : vector<1x128xf32> to vector<1x128xi32>
    %c0_i32_9 = arith.constant 0 : i32
    %c7_i32_10 = arith.constant 7 : i32
    %34 = vector.broadcast %c0_i32_9 : i32 to vector<1x128xi32>
    %35 = arith.maxsi %34, %33 : vector<1x128xi32>
    %36 = vector.broadcast %c7_i32_10 : i32 to vector<1x128xi32>
    %37 = arith.minsi %36, %35 : vector<1x128xi32>
    %38 = arith.fptosi %21 : vector<1x128xf32> to vector<1x128xi32>
    %c0_i32_11 = arith.constant 0 : i32
    %c7_i32_12 = arith.constant 7 : i32
    %39 = vector.broadcast %c0_i32_11 : i32 to vector<1x128xi32>
    %40 = arith.maxsi %39, %38 : vector<1x128xi32>
    %41 = vector.broadcast %c7_i32_12 : i32 to vector<1x128xi32>
    %42 = arith.minsi %41, %40 : vector<1x128xi32>
    %cst_13 = arith.constant 1.000000e+00 : f32
    %43 = vector.broadcast %cst_13 : f32 to vector<1x128xf32>
    %44 = arith.addf %21, %43 : vector<1x128xf32>
    %45 = arith.fptosi %44 : vector<1x128xf32> to vector<1x128xi32>
    %c0_i32_14 = arith.constant 0 : i32
    %c7_i32_15 = arith.constant 7 : i32
    %46 = vector.broadcast %c0_i32_14 : i32 to vector<1x128xi32>
    %47 = arith.maxsi %46, %45 : vector<1x128xi32>
    %48 = vector.broadcast %c7_i32_15 : i32 to vector<1x128xi32>
    %49 = arith.minsi %48, %47 : vector<1x128xi32>
    %50 = arith.fptosi %22 : vector<1x128xf32> to vector<1x128xi32>
    %c0_i32_16 = arith.constant 0 : i32
    %c7_i32_17 = arith.constant 7 : i32
    %51 = vector.broadcast %c0_i32_16 : i32 to vector<1x128xi32>
    %52 = arith.maxsi %51, %50 : vector<1x128xi32>
    %53 = vector.broadcast %c7_i32_17 : i32 to vector<1x128xi32>
    %54 = arith.minsi %53, %52 : vector<1x128xi32>
    %cst_18 = arith.constant 1.000000e+00 : f32
    %55 = vector.broadcast %cst_18 : f32 to vector<1x128xf32>
    %56 = arith.addf %22, %55 : vector<1x128xf32>
    %57 = arith.fptosi %56 : vector<1x128xf32> to vector<1x128xi32>
    %c0_i32_19 = arith.constant 0 : i32
    %c7_i32_20 = arith.constant 7 : i32
    %58 = vector.broadcast %c0_i32_19 : i32 to vector<1x128xi32>
    %59 = arith.maxsi %58, %57 : vector<1x128xi32>
    %60 = vector.broadcast %c7_i32_20 : i32 to vector<1x128xi32>
    %61 = arith.minsi %60, %59 : vector<1x128xi32>
    %62 = tpu.iota {dimensions = array<i32: 0>} : vector<8x1xi32>
    %c0_i32_21 = arith.constant 0 : i32
    %63 = vector.broadcast %c0_i32_21 : i32 to vector<8x1xi32>
    %64 = arith.addi %62, %63 : vector<8x1xi32>
    %65 = vector.broadcast %64 : vector<8x1xi32> to vector<8x128xi32>
    %66 = vector.broadcast %30 : vector<1x128xi32> to vector<8x128xi32>
    %67 = arith.cmpi eq, %65, %66 : vector<8x128xi32>
    %cst_22 = arith.constant 1.000000e+00 : f32
    %68 = vector.broadcast %cst_22 : f32 to vector<1x128xf32>
    %69 = arith.subf %68, %23 : vector<1x128xf32>
    %cst_23 = arith.constant 0.000000e+00 : f32
    %70 = vector.shape_cast %69 : vector<1x128xf32> to vector<1x128xf32>
    %71 = vector.broadcast %70 : vector<1x128xf32> to vector<8x128xf32>
    %72 = vector.broadcast %cst_23 : f32 to vector<8x128xf32>
    %73 = arith.select %67, %71, %72 : vector<8x128xi1>, vector<8x128xf32>
    %74 = vector.broadcast %64 : vector<8x1xi32> to vector<8x128xi32>
    %75 = vector.broadcast %37 : vector<1x128xi32> to vector<8x128xi32>
    %76 = arith.cmpi eq, %74, %75 : vector<8x128xi32>
    %cst_24 = arith.constant 0.000000e+00 : f32
    %77 = vector.shape_cast %23 : vector<1x128xf32> to vector<1x128xf32>
    %78 = vector.broadcast %77 : vector<1x128xf32> to vector<8x128xf32>
    %79 = vector.broadcast %cst_24 : f32 to vector<8x128xf32>
    %80 = arith.select %76, %78, %79 : vector<8x128xi1>, vector<8x128xf32>
    %81 = arith.addf %73, %80 : vector<8x128xf32>
    %82 = tpu.iota {dimensions = array<i32: 0>} : vector<8x1xi32>
    %c0_i32_25 = arith.constant 0 : i32
    %83 = vector.broadcast %c0_i32_25 : i32 to vector<8x1xi32>
    %84 = arith.addi %82, %83 : vector<8x1xi32>
    %85 = vector.broadcast %84 : vector<8x1xi32> to vector<8x128xi32>
    %86 = vector.broadcast %42 : vector<1x128xi32> to vector<8x128xi32>
    %87 = arith.cmpi eq, %85, %86 : vector<8x128xi32>
    %cst_26 = arith.constant 1.000000e+00 : f32
    %88 = vector.broadcast %cst_26 : f32 to vector<1x128xf32>
    %89 = arith.subf %88, %24 : vector<1x128xf32>
    %cst_27 = arith.constant 0.000000e+00 : f32
    %90 = vector.shape_cast %89 : vector<1x128xf32> to vector<1x128xf32>
    %91 = vector.broadcast %90 : vector<1x128xf32> to vector<8x128xf32>
    %92 = vector.broadcast %cst_27 : f32 to vector<8x128xf32>
    %93 = arith.select %87, %91, %92 : vector<8x128xi1>, vector<8x128xf32>
    %94 = vector.broadcast %84 : vector<8x1xi32> to vector<8x128xi32>
    %95 = vector.broadcast %49 : vector<1x128xi32> to vector<8x128xi32>
    %96 = arith.cmpi eq, %94, %95 : vector<8x128xi32>
    %cst_28 = arith.constant 0.000000e+00 : f32
    %97 = vector.shape_cast %24 : vector<1x128xf32> to vector<1x128xf32>
    %98 = vector.broadcast %97 : vector<1x128xf32> to vector<8x128xf32>
    %99 = vector.broadcast %cst_28 : f32 to vector<8x128xf32>
    %100 = arith.select %96, %98, %99 : vector<8x128xi1>, vector<8x128xf32>
    %101 = arith.addf %93, %100 : vector<8x128xf32>
    %102 = tpu.iota {dimensions = array<i32: 0>} : vector<8x1xi32>
    %103 = vector.broadcast %0 : i32 to vector<8x1xi32>
    %104 = arith.addi %102, %103 : vector<8x1xi32>
    %105 = vector.broadcast %104 : vector<8x1xi32> to vector<8x128xi32>
    %106 = vector.broadcast %54 : vector<1x128xi32> to vector<8x128xi32>
    %107 = arith.cmpi eq, %105, %106 : vector<8x128xi32>
    %cst_29 = arith.constant 1.000000e+00 : f32
    %108 = vector.broadcast %cst_29 : f32 to vector<1x128xf32>
    %109 = arith.subf %108, %25 : vector<1x128xf32>
    %cst_30 = arith.constant 0.000000e+00 : f32
    %110 = vector.shape_cast %109 : vector<1x128xf32> to vector<1x128xf32>
    %111 = vector.broadcast %110 : vector<1x128xf32> to vector<8x128xf32>
    %112 = vector.broadcast %cst_30 : f32 to vector<8x128xf32>
    %113 = arith.select %107, %111, %112 : vector<8x128xi1>, vector<8x128xf32>
    %114 = vector.broadcast %104 : vector<8x1xi32> to vector<8x128xi32>
    %115 = vector.broadcast %61 : vector<1x128xi32> to vector<8x128xi32>
    %116 = arith.cmpi eq, %114, %115 : vector<8x128xi32>
    %cst_31 = arith.constant 0.000000e+00 : f32
    %117 = vector.shape_cast %25 : vector<1x128xf32> to vector<1x128xf32>
    %118 = vector.broadcast %117 : vector<1x128xf32> to vector<8x128xf32>
    %119 = vector.broadcast %cst_31 : f32 to vector<8x128xf32>
    %120 = arith.select %116, %118, %119 : vector<8x128xi1>, vector<8x128xf32>
    %121 = arith.addf %113, %120 : vector<8x128xf32>
    %122 = vector.shape_cast %121 : vector<8x128xf32> to vector<8x1x128xf32>
    %123 = vector.shape_cast %101 : vector<8x128xf32> to vector<1x8x128xf32>
    %124 = vector.broadcast %122 : vector<8x1x128xf32> to vector<8x8x128xf32>
    %125 = vector.broadcast %123 : vector<1x8x128xf32> to vector<8x8x128xf32>
    %126 = arith.mulf %124, %125 : vector<8x8x128xf32>
    %127 = vector.shape_cast %126 : vector<8x8x128xf32> to vector<8x8x1x128xf32>
    %128 = vector.shape_cast %81 : vector<8x128xf32> to vector<1x1x8x128xf32>
    %129 = vector.broadcast %127 : vector<8x8x1x128xf32> to vector<8x8x8x128xf32>
    %130 = vector.broadcast %128 : vector<1x1x8x128xf32> to vector<8x8x8x128xf32>
    %131 = arith.mulf %129, %130 : vector<8x8x8x128xf32>
    %132 = vector.shape_cast %131 : vector<8x8x8x128xf32> to vector<512x128xf32>
    %c0_32 = arith.constant 0 : index
    %c0_33 = arith.constant 0 : index
    %c0_34 = arith.constant 0 : index
    %133 = vector.load %arg4[%c0_32, %c0_33, %c0_34] : memref<1x4x512xf32, #tpu.memory_space<vmem>>, vector<1x4x512xf32>
    %134 = vector.shape_cast %133 : vector<1x4x512xf32> to vector<4x512xf32>
    %cst_35 = arith.constant dense<0.000000e+00> : vector<4x128xf32>
    %135 = tpu.matmul %134, %132, %cst_35 {dimension_numbers = #tpu.dot_dimension_numbers<[1], [0], [0], [1], [0, 0, 1, 1], [], []>} : vector<4x512xf32>, vector<512x128xf32>, vector<4x128xf32> -> vector<4x128xf32>
    %c0_i32_36 = arith.constant 0 : i32
    %136 = arith.cmpi eq, %arg2, %c0_i32_36 : i32
    %137 = arith.extui %136 : i1 to i32
    %c0_i32_37 = arith.constant 0 : i32
    %138 = arith.cmpi ne, %137, %c0_i32_37 : i32
    scf.if %138 {
      %cst_44 = arith.constant 0.000000e+00 : f32
      %145 = vector.broadcast %cst_44 : f32 to vector<4x128xf32>
      %c0_45 = arith.constant 0 : index
      %c0_46 = arith.constant 0 : index
      %c0_47 = arith.constant 0 : index
      %146 = vector.load %arg5[%c0_45, %c0_46, %c0_47] : memref<1x4x128xf32, #tpu.memory_space<vmem>>, vector<1x4x128xf32>
      %147 = vector.shape_cast %146 : vector<1x4x128xf32> to vector<4x128xf32>
      %148 = vector.shape_cast %145 : vector<4x128xf32> to vector<1x4x128xf32>
      tpu.vector_store %arg5[%c0_45, %c0_46, %c0_47], %148 {strides = array<i32>} : memref<1x4x128xf32, #tpu.memory_space<vmem>>, vector<1x4x128xf32>,
    } else {
    }
    %c0_38 = arith.constant 0 : index
    %c0_39 = arith.constant 0 : index
    %c0_40 = arith.constant 0 : index
    %139 = vector.load %arg5[%c0_38, %c0_39, %c0_40] : memref<1x4x128xf32, #tpu.memory_space<vmem>>, vector<1x4x128xf32>
    %140 = vector.shape_cast %139 : vector<1x4x128xf32> to vector<4x128xf32>
    %141 = arith.addf %140, %135 : vector<4x128xf32>
    %c0_41 = arith.constant 0 : index
    %c0_42 = arith.constant 0 : index
    %c0_43 = arith.constant 0 : index
    %142 = vector.load %arg5[%c0_41, %c0_42, %c0_43] : memref<1x4x128xf32, #tpu.memory_space<vmem>>, vector<1x4x128xf32>
    %143 = vector.shape_cast %142 : vector<1x4x128xf32> to vector<4x128xf32>
    %144 = vector.shape_cast %141 : vector<4x128xf32> to vector<1x4x128xf32>
    tpu.vector_store %arg5[%c0_41, %c0_42, %c0_43], %144 {strides = array<i32>} : memref<1x4x128xf32, #tpu.memory_space<vmem>>, vector<1x4x128xf32>,
    return
  }
  func.func @transform_0(%arg0: i32, %arg1: i32, %arg2: i32) -> (i32, i32, i32) {
    %c0_i32 = arith.constant 0 : i32
    %c0_i32_0 = arith.constant 0 : i32
    return %arg0, %c0_i32, %arg1 : i32, i32, i32
  }
  func.func @transform_1(%arg0: i32, %arg1: i32, %arg2: i32) -> (i32, i32, i32) {
    %c0_i32 = arith.constant 0 : i32
    %c0_i32_0 = arith.constant 0 : i32
    return %arg0, %c0_i32, %arg2 : i32, i32, i32
  }
  func.func @transform_2(%arg0: i32, %arg1: i32, %arg2: i32) -> (i32, i32, i32) {
    %c0_i32 = arith.constant 0 : i32
    %c0_i32_0 = arith.constant 0 : i32
    return %arg0, %c0_i32, %arg1 : i32, i32, i32
  }
}

</mosaic_0001>

<llo_original>
// kernel: tpu_custom_call.1
$region0: #{tpu_custom_call.1}
  #allocation0 [shape = 'u32[]', space=smem, size = 0x4, offset = 0x4, fixed_abs, tag = 'smem constant byte address 0x4 - core index']
  #allocation1 [shape = 'u32[144,128]{1,0:T(1,128)}', space=vmem, size = 0x12000, scoped, tag = 'internal scratch']
  %s0 = inlined_call_operand.vmem [shape: f32[2,3,128], index: 0, kind: input, shape index: {}]
  %s1 = inlined_call_operand.hbm [shape: f32[2,4,512], index: 1, kind: input, shape index: {}]
  %s2 = inlined_call_operand.hbm [shape: f32[2,4,128], index: 2, kind: output, shape index: {}]
  %s3 = sld [smem:[#allocation0]]
  $region49: #{tpu_custom_call.1} parent=0
    _
  %s5 = ssub.s32 1, %s3
  %s6 = scalar_select 0, %s5, %s3
  $region1: #{tpu_custom_call.1} parent=0
    #allocation2 [shape = 'u8[16384]{0}', space=vmem, size = 0x4000, scoped, tag = 'input window, operand 1']
    #allocation3 [shape = 's32[2]{0}', space=sflag, size = 0x8, scoped, tag = 'scoped memory for tpu_custom_call.1']
    #allocation4 [shape = 's32[2]{0}', space=sflag, size = 0x8, scoped, tag = 'scoped memory for tpu_custom_call.1']
    #allocation5 [shape = 'u8[4096]{0}', space=vmem, size = 0x1000, scoped, tag = 'output window, operand 0']
    %7 = vsyncpa [#allocation3], 0
    %s8 = scalar_lea.sflag [#allocation3], 1
    %9 = vsyncpa %s8, 0
    %10 = vsyncpa [#allocation4], 0
    %s11 = scalar_lea.sflag [#allocation4], 1
    %12 = vsyncpa %s11, 0
    loop: start=0, step=1, limit=4
    $region2: #{tpu_custom_call.1} parent=1 // loop_pre_header
      _
    $region3: #{tpu_custom_call.1} parent=1 // loop_header
      %s14 = sphi 0, %s18
      %p15 = scmp.ge.s32.totalorder %s14, 4
      %s21 = sphi 0, %s40
      %s22 = sphi 0, %s36
      %s23 = sphi 0, %s32
      %s24 = sphi 0, %s21
      %s25 = sphi 0, %s22
      %s26 = sphi 0, %s23
      %s27 = sphi 0, %s24
      %s28 = sphi 0, %s25
      %s29 = sphi 0, %s26
      %s45 = sphi 0, %s47
      %s48 = sphi 0, %s45
      %s49 = sphi 0, %s48
      %s65 = sphi 0, %s49
      %s73 = sphi 0, %s75
      %s76 = sphi 0, %s73
      %s77 = sphi 0, %s76
      %s93 = sphi 0, %s77
      %s101 = sphi 0, %s103
      %s104 = sphi 0, %s101
      %s105 = sphi 0, %s104
      %s121 = sphi 0, %s105
    $region4: #{tpu_custom_call.1} parent=1 // loop_header_branch
      %17 = sbr.rel (%p15) target = $region8
    $region5: #{tpu_custom_call.1} parent=1 // loop_body
      %s19 = ssub.s32 %s14, 1
      %s20 = ssub.s32 %s14, 2
      %s30 = sadd.s32 1, %s23
      %p31 = scmp.ge.s32.totalorder %s30, 1
      %s32 = scalar_select %p31, 0, %s30
      %s33 = sadd.s32 1, %s22
      %s34 = scalar_select %p31, %s33, %s22
      %p35 = scmp.ge.s32.totalorder %s34, 1
      %s36 = scalar_select %p35, 0, %s34
      %s37 = sadd.s32 1, %s21
      %s38 = scalar_select %p35, %s37, %s21
      %p39 = scmp.ge.s32.totalorder %s38, 2
      %s40 = scalar_select %p39, 0, %s38
      %s41 = ssub.s32 %s21, %s40
      %s42 = ssub.s32 %s22, %s36
      %s43 = sor.u32 %s41, %s42
      %p44 = scmp.eq.s32.totalorder %s43, 0
      %s46 = sadd.s32 %s45, 1
      %s47 = scalar_select %p44, %s45, %s46
      %p50 = pneg %p44
      %p51 = scmp.eq.s32.totalorder %s14, 1
      %p52 = por %p50, %p51
      %p53 = scmp.ne.s32.totalorder %s45, %s48
      %p54 = scmp.eq.s32.totalorder %s14, 0
      %p55 = por %p53, %p54
      %p56 = scmp.ne.s32.totalorder %s45, %s48
      %p57 = scmp.eq.s32.totalorder %s19, 1
      %p58 = por %p56, %p57
      %p59 = scmp.ne.s32.totalorder %s48, %s49
      %p60 = scmp.eq.s32.totalorder %s19, 0
      %p61 = por %p59, %p60
      %p62 = scmp.ne.s32.totalorder %s48, %s49
      %p63 = scmp.eq.s32.totalorder %s20, 1
      %p64 = por %p62, %p63
      %p66 = scmp.ne.s32.totalorder %s49, %s65
      %p67 = scmp.eq.s32.totalorder %s20, 0
      %p68 = por %p66, %p67
      %s69 = ssub.s32 %s21, %s40
      %s70 = ssub.s32 %s23, %s32
      %s71 = sor.u32 %s69, %s70
      %p72 = scmp.eq.s32.totalorder %s71, 0
      %s74 = sadd.s32 %s73, 1
      %s75 = scalar_select %p72, %s73, %s74
      %p78 = pneg %p72
      %p79 = scmp.eq.s32.totalorder %s14, 1
      %p80 = por %p78, %p79
      %p81 = scmp.ne.s32.totalorder %s73, %s76
      %p82 = scmp.eq.s32.totalorder %s14, 0
      %p83 = por %p81, %p82
      %p84 = scmp.ne.s32.totalorder %s73, %s76
      %p85 = scmp.eq.s32.totalorder %s19, 1
      %p86 = por %p84, %p85
      %p87 = scmp.ne.s32.totalorder %s76, %s77
      %p88 = scmp.eq.s32.totalorder %s19, 0
      %p89 = por %p87, %p88
      %p90 = scmp.ne.s32.totalorder %s76, %s77
      %p91 = scmp.eq.s32.totalorder %s20, 1
      %p92 = por %p90, %p91
      %p94 = scmp.ne.s32.totalorder %s77, %s93
      %p95 = scmp.eq.s32.totalorder %s20, 0
      %p96 = por %p94, %p95
      %s97 = ssub.s32 %s21, %s40
      %s98 = ssub.s32 %s22, %s36
      %s99 = sor.u32 %s97, %s98
      %p100 = scmp.eq.s32.totalorder %s99, 0
      %s102 = sadd.s32 %s101, 1
      %s103 = scalar_select %p100, %s101, %s102
      %p106 = pneg %p100
      %p107 = scmp.eq.s32.totalorder %s14, 1
      %p108 = por %p106, %p107
      %p109 = scmp.ne.s32.totalorder %s101, %s104
      %p110 = scmp.eq.s32.totalorder %s14, 0
      %p111 = por %p109, %p110
      %p112 = scmp.ne.s32.totalorder %s101, %s104
      %p113 = scmp.eq.s32.totalorder %s19, 1
      %p114 = por %p112, %p113
      %p115 = scmp.ne.s32.totalorder %s104, %s105
      %p116 = scmp.eq.s32.totalorder %s19, 0
      %p117 = por %p115, %p116
      %p118 = scmp.ne.s32.totalorder %s104, %s105
      %p119 = scmp.eq.s32.totalorder %s20, 1
      %p120 = por %p118, %p119
      %p122 = scmp.ne.s32.totalorder %s105, %s121
      %p123 = scmp.eq.s32.totalorder %s20, 0
      %p124 = por %p122, %p123
      %p125 = scmp.le.s32.totalorder 1, %s14
      %p126 = scmp.lt.s32.totalorder %s14, 3
      %p127 = pnand %p125, %p126
      %p128 = pneg %p127
      // Predicated region
      $region9: #{tpu_custom_call.1} parent=5 // pred_check
        _
      $region10: #{tpu_custom_call.1} parent=5 // pred_check_branch
        %130 = sbr.rel (%p127) target = $region12
      $region11: #{tpu_custom_call.1} parent=5 // pred_region
        %s131 = ssub.s32 %s14, 1
      $region12: #{tpu_custom_call.1} parent=5 // pred_fallthru
        _
      %p132 = scmp.lt.s32.totalorder %s14, 2
      // Predicated region
      $region13: #{tpu_custom_call.1} parent=5 // pred_check
        %p133 = pneg %p132
      $region14: #{tpu_custom_call.1} parent=5 // pred_check_branch
        %135 = sbr.rel (%p133) target = $region16
      $region15: #{tpu_custom_call.1} parent=5 // pred_region
        // Predicated region
        $region17: #{tpu_custom_call.1} parent=15 // pred_check
          %p136 = pneg %p55
        $region18: #{tpu_custom_call.1} parent=15 // pred_check_branch
          %138 = sbr.rel (%p136) target = $region20
        $region19: #{tpu_custom_call.1} parent=15 // pred_region
          %p139 = scmp.lt.s32.totalorder %s21, 1
          %s140 = scalar_select %p139, %s21, 1
          %p141 = scmp.lt.s32.totalorder %s22, 0
          %s142 = scalar_select %p141, %s22, 0
          %s143 = sadd.s32 %s142, %s140
          %s144 = smul.addr %s143, 4
          %s145 = scalar_lea.vmem %s0, %s144
        $region20: #{tpu_custom_call.1} parent=15 // pred_fallthru
          _
        // Predicated region
        $region21: #{tpu_custom_call.1} parent=15 // pred_check
          %p146 = pneg %p83
        $region22: #{tpu_custom_call.1} parent=15 // pred_check_branch
          %148 = sbr.rel (%p146) target = $region24
        $region23: #{tpu_custom_call.1} parent=15 // pred_region
          %s149 = sand.u32 %s73, 1
          %s150 = scalar_lea.sflag [#allocation3], %s149
          %s151 = sand.u32 %s73, 1
          %s152 = smul.addr %s151, 16
          %s153 = scalar_lea.vmem [#allocation2], %s152
          %s154 = smul.u32 4, %s23
          %s156 = ssub.s32 256, 256
          %157 = vsyncadd %s150, %s156
          %s158 = smul.addr %s21, 4
          %s159 = sadd.s32 %s154, %s158
          %s160 = smul.addr %s159, 64
          %s161 = scalar_lea.hbm %s1, %s160
          %s163 = sshll.u32 %s153, 4
          %s164 = int_to_ptr.vmem [resolvable:$true] %s163
          %166 = dma.hbm_to_vmem [thread:$0]  %s161, 256, %s164, %s150
        $region24: #{tpu_custom_call.1} parent=15 // pred_fallthru
          _
      $region16: #{tpu_custom_call.1} parent=5 // pred_fallthru
        _
      %p167 = scmp.le.s32.totalorder 1, %s14
      %p168 = scmp.lt.s32.totalorder %s14, 3
      %p169 = pnand %p167, %p168
      %p170 = pneg %p169
      // Predicated region
      $region25: #{tpu_custom_call.1} parent=5 // pred_check
        _
      $region26: #{tpu_custom_call.1} parent=5 // pred_check_branch
        %172 = sbr.rel (%p169) target = $region28
      $region27: #{tpu_custom_call.1} parent=5 // pred_region
        %s173 = ssub.s32 %s14, 1
        %s174 = sand.u32 %s76, 1
        %s175 = scalar_lea.sflag [#allocation3], %s174
        %s176 = sand.u32 %s76, 1
        %s177 = smul.addr %s176, 16
        %s178 = scalar_lea.vmem [#allocation2], %s177
        // Predicated region
        $region29: #{tpu_custom_call.1} parent=27 // pred_check
          %p179 = pneg %p89
        $region30: #{tpu_custom_call.1} parent=27 // pred_check_branch
          %181 = sbr.rel (%p179) target = $region32
        $region31: #{tpu_custom_call.1} parent=27 // pred_region
          %182 = dma.done %s175, 256
        $region32: #{tpu_custom_call.1} parent=27 // pred_fallthru
          _
        %p183 = scmp.lt.s32.totalorder %s24, 1
        %s184 = scalar_select %p183, %s24, 1
        %p185 = scmp.lt.s32.totalorder %s25, 0
        %s186 = scalar_select %p185, %s25, 0
        %s187 = sadd.s32 %s186, %s184
        %s188 = smul.addr %s187, 4
        %s189 = scalar_lea.vmem %s0, %s188
        %p190 = pneg %p61
        %p191 = pneg %p58
        %s192 = sand.u32 %s76, 1
        %s193 = scalar_lea.sflag [#allocation3], %s192
        %s194 = sand.u32 %s76, 1
        %s195 = smul.addr %s194, 16
        %s196 = scalar_lea.vmem [#allocation2], %s195
        %p197 = pneg %p89
        %p198 = pneg %p86
        %p199 = pneg %p117
        %p200 = pneg %p114
        %s201 = sand.u32 %s104, 1
        %s202 = scalar_lea.sflag [#allocation4], %s201
        %s203 = sand.u32 %s104, 1
        %s204 = smul.addr %s203, 4
        %s205 = scalar_lea.vmem [#allocation5], %s204
        %p206 = scmp.lt.s32.totalorder %s24, 1
        %s207 = scalar_select %p206, %s24, 1
        %p208 = scmp.lt.s32.totalorder %s25, 0
        %s209 = scalar_select %p208, %s25, 0
        %s210 = sadd.s32 %s209, %s207
        %s211 = smul.addr %s210, 4
        %s212 = scalar_lea.vmem %s0, %s211
        %s213 = smul.u32 4, %s26
        %s214 = smul.u32 %s26, 8
        %v215 = vld [vmem:[%s212] sm:$0x7]
        %v216 = vmax.f32 %v215, -1.0
        %v217 = vmin.f32 %v216, 1.0
        %v218 = vadd.f32 %v217, 1.0
        %v219 = vmul.f32 %v218, 0.5
        %v220 = vmul.f32 %v219, 7.0
        %v221 = vfloor.f32 %v220
        %v222 = vsub.f32 %v220, %v221
        %v223 = vcvt.f32.s32.to.zero.pseudo %v221
        %vm224 = vcmp.gt.s32.totalorder %v223, 0
        %v225 = vsel %vm224, %v223, 0
        %vm226 = vcmp.lt.s32.totalorder %v225, 7
        %v227 = vsel %vm226, %v225, 7
        %v228 = vadd.f32 %v221, 1.0
        %v229 = vcvt.f32.s32.to.zero.pseudo %v228
        %vm230 = vcmp.gt.s32.totalorder %v229, 0
        %v231 = vsel %vm230, %v229, 0
        %vm232 = vcmp.lt.s32.totalorder %v231, 7
        %v233 = vsel %vm232, %v231, 7
        %v234 = vlaneseq
        %v235 = vshrl.u32 %v234, 7
        %v236 = vlaneseq
        %v237 = vshrl.u32 %v236, 7
        %v238 = vsub.s32 0, %v237
        %v239 = vrot.slane %v227, %v238
        %vm240 = vcmp.eq.s32.totalorder %v235, %v239
        %v241 = vsub.f32 1.0, %v222
        %v242 = vlaneseq
        %v243 = vshrl.u32 %v242, 7
        %v244 = vsub.s32 0, %v243
        %v245 = vrot.slane %v241, %v244
        %v246 = vsel %vm240, %v245, 0.0
        %v247 = vlaneseq
        %v248 = vshrl.u32 %v247, 7
        %v249 = vsub.s32 0, %v248
        %v250 = vrot.slane %v233, %v249
        %vm251 = vcmp.eq.s32.totalorder %v235, %v250
        %v252 = vlaneseq
        %v253 = vshrl.u32 %v252, 7
        %v254 = vsub.s32 0, %v253
        %v255 = vrot.slane %v222, %v254
        %v256 = vsel %vm251, %v255, 0.0
        %v257 = vadd.f32 %v246, %v256
        %v258 = vlaneseq
        %v259 = vshrl.u32 %v258, 7
        %v260 = vsub.s32 1, %v259
        %v261 = vrot.slane %v227, %v260
        %vm262 = vcmp.eq.s32.totalorder %v235, %v261
        %v263 = vlaneseq
        %v264 = vshrl.u32 %v263, 7
        %v265 = vsub.s32 1, %v264
        %v266 = vrot.slane %v241, %v265
        %v267 = vsel %vm262, %v266, 0.0
        %v268 = vlaneseq
        %v269 = vshrl.u32 %v268, 7
        %v270 = vsub.s32 1, %v269
        %v271 = vrot.slane %v233, %v270
        %vm272 = vcmp.eq.s32.totalorder %v235, %v271
        %v273 = vlaneseq
        %v274 = vshrl.u32 %v273, 7
        %v275 = vsub.s32 1, %v274
        %v276 = vrot.slane %v222, %v275
        %v277 = vsel %vm272, %v276, 0.0
        %v278 = vadd.f32 %v267, %v277
        %v279 = vstv %s214
        %v280 = vadd.s32 %v235, %v279
        %v281 = vlaneseq
        %v282 = vshrl.u32 %v281, 7
        %v283 = vsub.s32 2, %v282
        %v284 = vrot.slane %v227, %v283
        %vm285 = vcmp.eq.s32.totalorder %v280, %v284
        %v286 = vlaneseq
        %v287 = vshrl.u32 %v286, 7
        %v288 = vsub.s32 2, %v287
        %v289 = vrot.slane %v241, %v288
        %v290 = vsel %vm285, %v289, 0.0
        %v291 = vlaneseq
        %v292 = vshrl.u32 %v291, 7
        %v293 = vsub.s32 2, %v292
        %v294 = vrot.slane %v233, %v293
        %vm295 = vcmp.eq.s32.totalorder %v280, %v294
        %v296 = vlaneseq
        %v297 = vshrl.u32 %v296, 7
        %v298 = vsub.s32 2, %v297
        %v299 = vrot.slane %v222, %v298
        %v300 = vsel %vm295, %v299, 0.0
        %v301 = vadd.f32 %v290, %v300
        %v303 = vcombine.high %v301, %v301
        %v305 = vunpack.c.l.s4 1966171168
        %v306 = vunpack.c.0.s8 %v305
        %v307 = vlaneseq
        %v308 = vshrl.u32 %v307, 7
        %v309 = vsub.s32 %v306, %v308
        %v310 = vrot.slane %v301, %v309
        %v312 = vunpack.c.l.s4 1966171168
        %v313 = vunpack.c.0.s8 %v312
        %v314 = vlaneseq
        %v315 = vshrl.u32 %v314, 7
        %v316 = vsub.s32 %v313, %v315
        %v317 = vrot.slane %v303, %v316
        %v318 = vcombine.high %v310, %v310
        %v319 = vcombine.high %v317, %v317
        %v321 = vunpack.c.l.s4 1966171168
        %v322 = vunpack.c.0.s8 %v321
        %v323 = vlaneseq
        %v324 = vshrl.u32 %v323, 7
        %v325 = vsub.s32 %v322, %v324
        %v326 = vrot.slane %v310, %v325
        %v328 = vunpack.c.l.s4 1966171168
        %v329 = vunpack.c.0.s8 %v328
        %v330 = vlaneseq
        %v331 = vshrl.u32 %v330, 7
        %v332 = vsub.s32 %v329, %v331
        %v333 = vrot.slane %v317, %v332
        %v335 = vunpack.c.l.s4 1966171168
        %v336 = vunpack.c.0.s8 %v335
        %v337 = vlaneseq
        %v338 = vshrl.u32 %v337, 7
        %v339 = vsub.s32 %v336, %v338
        %v340 = vrot.slane %v318, %v339
        %v342 = vunpack.c.l.s4 1966171168
        %v343 = vunpack.c.0.s8 %v342
        %v344 = vlaneseq
        %v345 = vshrl.u32 %v344, 7
        %v346 = vsub.s32 %v343, %v345
        %v347 = vrot.slane %v319, %v346
        %v348 = vcombine.high %v326, %v326
        %v349 = vcombine.high %v333, %v333
        %v350 = vcombine.high %v340, %v340
        %v351 = vcombine.high %v347, %v347
        %v352 = vlaneseq
        %v353 = vshrl.u32 %v352, 7
        %v354 = vsub.s32 0, %v353
        %v355 = vrot.slane %v326, %v354
        %v356 = vlaneseq
        %v357 = vshrl.u32 %v356, 7
        %v358 = vsub.s32 0, %v357
        %v359 = vrot.slane %v340, %v358
        %v360 = vlaneseq
        %v361 = vshrl.u32 %v360, 7
        %v362 = vsub.s32 0, %v361
        %v363 = vrot.slane %v348, %v362
        %v364 = vlaneseq
        %v365 = vshrl.u32 %v364, 7
        %v366 = vsub.s32 0, %v365
        %v367 = vrot.slane %v350, %v366
        %v368 = vlaneseq
        %v369 = vshrl.u32 %v368, 7
        %v370 = vsub.s32 0, %v369
        %v371 = vrot.slane %v333, %v370
        %v372 = vlaneseq
        %v373 = vshrl.u32 %v372, 7
        %v374 = vsub.s32 0, %v373
        %v375 = vrot.slane %v347, %v374
        %v376 = vlaneseq
        %v377 = vshrl.u32 %v376, 7
        %v378 = vsub.s32 0, %v377
        %v379 = vrot.slane %v349, %v378
        %v380 = vlaneseq
        %v381 = vshrl.u32 %v380, 7
        %v382 = vsub.s32 0, %v381
        %v383 = vrot.slane %v351, %v382
        %v392 = vmul.f32 %v355, %v278
        %v393 = vmul.f32 %v359, %v278
        %v394 = vmul.f32 %v363, %v278
        %v395 = vmul.f32 %v367, %v278
        %v396 = vmul.f32 %v371, %v278
        %v397 = vmul.f32 %v375, %v278
        %v398 = vmul.f32 %v379, %v278
        %v399 = vmul.f32 %v383, %v278
        %v408 = vcombine.high %v392, %v392
        %v410 = vunpack.c.l.s4 1966171168
        %v411 = vunpack.c.0.s8 %v410
        %v412 = vlaneseq
        %v413 = vshrl.u32 %v412, 7
        %v414 = vsub.s32 %v411, %v413
        %v415 = vrot.slane %v392, %v414
        %v417 = vunpack.c.l.s4 1966171168
        %v418 = vunpack.c.0.s8 %v417
        %v419 = vlaneseq
        %v420 = vshrl.u32 %v419, 7
        %v421 = vsub.s32 %v418, %v420
        %v422 = vrot.slane %v408, %v421
        %v423 = vcombine.high %v415, %v415
        %v424 = vcombine.high %v422, %v422
        %v426 = vunpack.c.l.s4 1966171168
        %v427 = vunpack.c.0.s8 %v426
        %v428 = vlaneseq
        %v429 = vshrl.u32 %v428, 7
        %v430 = vsub.s32 %v427, %v429
        %v431 = vrot.slane %v415, %v430
        %v433 = vunpack.c.l.s4 1966171168
        %v434 = vunpack.c.0.s8 %v433
        %v435 = vlaneseq
        %v436 = vshrl.u32 %v435, 7
        %v437 = vsub.s32 %v434, %v436
        %v438 = vrot.slane %v422, %v437
        %v440 = vunpack.c.l.s4 1966171168
        %v441 = vunpack.c.0.s8 %v440
        %v442 = vlaneseq
        %v443 = vshrl.u32 %v442, 7
        %v444 = vsub.s32 %v441, %v443
        %v445 = vrot.slane %v423, %v444
        %v447 = vunpack.c.l.s4 1966171168
        %v448 = vunpack.c.0.s8 %v447
        %v449 = vlaneseq
        %v450 = vshrl.u32 %v449, 7
        %v451 = vsub.s32 %v448, %v450
        %v452 = vrot.slane %v424, %v451
        %v453 = vcombine.high %v431, %v431
        %v454 = vcombine.high %v438, %v438
        %v455 = vcombine.high %v445, %v445
        %v456 = vcombine.high %v452, %v452
        %v457 = vcombine.high %v393, %v393
        %v459 = vunpack.c.l.s4 1966171168
        %v460 = vunpack.c.0.s8 %v459
        %v461 = vlaneseq
        %v462 = vshrl.u32 %v461, 7
        %v463 = vsub.s32 %v460, %v462
        %v464 = vrot.slane %v393, %v463
        %v466 = vunpack.c.l.s4 1966171168
        %v467 = vunpack.c.0.s8 %v466
        %v468 = vlaneseq
        %v469 = vshrl.u32 %v468, 7
        %v470 = vsub.s32 %v467, %v469
        %v471 = vrot.slane %v457, %v470
        %v472 = vcombine.high %v464, %v464
        %v473 = vcombine.high %v471, %v471
        %v475 = vunpack.c.l.s4 1966171168
        %v476 = vunpack.c.0.s8 %v475
        %v477 = vlaneseq
        %v478 = vshrl.u32 %v477, 7
        %v479 = vsub.s32 %v476, %v478
        %v480 = vrot.slane %v464, %v479
        %v482 = vunpack.c.l.s4 1966171168
        %v483 = vunpack.c.0.s8 %v482
        %v484 = vlaneseq
        %v485 = vshrl.u32 %v484, 7
        %v486 = vsub.s32 %v483, %v485
        %v487 = vrot.slane %v471, %v486
        %v489 = vunpack.c.l.s4 1966171168
        %v490 = vunpack.c.0.s8 %v489
        %v491 = vlaneseq
        %v492 = vshrl.u32 %v491, 7
        %v493 = vsub.s32 %v490, %v492
        %v494 = vrot.slane %v472, %v493
        %v496 = vunpack.c.l.s4 1966171168
        %v497 = vunpack.c.0.s8 %v496
        %v498 = vlaneseq
        %v499 = vshrl.u32 %v498, 7
        %v500 = vsub.s32 %v497, %v499
        %v501 = vrot.slane %v473, %v500
        %v502 = vcombine.high %v480, %v480
        %v503 = vcombine.high %v487, %v487
        %v504 = vcombine.high %v494, %v494
        %v505 = vcombine.high %v501, %v501
        %v506 = vcombine.high %v394, %v394
        %v508 = vunpack.c.l.s4 1966171168
        %v509 = vunpack.c.0.s8 %v508
        %v510 = vlaneseq
        %v511 = vshrl.u32 %v510, 7
        %v512 = vsub.s32 %v509, %v511
        %v513 = vrot.slane %v394, %v512
        %v515 = vunpack.c.l.s4 1966171168
        %v516 = vunpack.c.0.s8 %v515
        %v517 = vlaneseq
        %v518 = vshrl.u32 %v517, 7
        %v519 = vsub.s32 %v516, %v518
        %v520 = vrot.slane %v506, %v519
        %v521 = vcombine.high %v513, %v513
        %v522 = vcombine.high %v520, %v520
        %v524 = vunpack.c.l.s4 1966171168
        %v525 = vunpack.c.0.s8 %v524
        %v526 = vlaneseq
        %v527 = vshrl.u32 %v526, 7
        %v528 = vsub.s32 %v525, %v527
        %v529 = vrot.slane %v513, %v528
        %v531 = vunpack.c.l.s4 1966171168
        %v532 = vunpack.c.0.s8 %v531
        %v533 = vlaneseq
        %v534 = vshrl.u32 %v533, 7
        %v535 = vsub.s32 %v532, %v534
        %v536 = vrot.slane %v520, %v535
        %v538 = vunpack.c.l.s4 1966171168
        %v539 = vunpack.c.0.s8 %v538
        %v540 = vlaneseq
        %v541 = vshrl.u32 %v540, 7
        %v542 = vsub.s32 %v539, %v541
        %v543 = vrot.slane %v521, %v542
        %v545 = vunpack.c.l.s4 1966171168
        %v546 = vunpack.c.0.s8 %v545
        %v547 = vlaneseq
        %v548 = vshrl.u32 %v547, 7
        %v549 = vsub.s32 %v546, %v548
        %v550 = vrot.slane %v522, %v549
        %v551 = vcombine.high %v529, %v529
        %v552 = vcombine.high %v536, %v536
        %v553 = vcombine.high %v543, %v543
        %v554 = vcombine.high %v550, %v550
        %v555 = vcombine.high %v395, %v395
        %v557 = vunpack.c.l.s4 1966171168
        %v558 = vunpack.c.0.s8 %v557
        %v559 = vlaneseq
        %v560 = vshrl.u32 %v559, 7
        %v561 = vsub.s32 %v558, %v560
        %v562 = vrot.slane %v395, %v561
        %v564 = vunpack.c.l.s4 1966171168
        %v565 = vunpack.c.0.s8 %v564
        %v566 = vlaneseq
        %v567 = vshrl.u32 %v566, 7
        %v568 = vsub.s32 %v565, %v567
        %v569 = vrot.slane %v555, %v568
        %v570 = vcombine.high %v562, %v562
        %v571 = vcombine.high %v569, %v569
        %v573 = vunpack.c.l.s4 1966171168
        %v574 = vunpack.c.0.s8 %v573
        %v575 = vlaneseq
        %v576 = vshrl.u32 %v575, 7
        %v577 = vsub.s32 %v574, %v576
        %v578 = vrot.slane %v562, %v577
        %v580 = vunpack.c.l.s4 1966171168
        %v581 = vunpack.c.0.s8 %v580
        %v582 = vlaneseq
        %v583 = vshrl.u32 %v582, 7
        %v584 = vsub.s32 %v581, %v583
        %v585 = vrot.slane %v569, %v584
        %v587 = vunpack.c.l.s4 1966171168
        %v588 = vunpack.c.0.s8 %v587
        %v589 = vlaneseq
        %v590 = vshrl.u32 %v589, 7
        %v591 = vsub.s32 %v588, %v590
        %v592 = vrot.slane %v570, %v591
        %v594 = vunpack.c.l.s4 1966171168
        %v595 = vunpack.c.0.s8 %v594
        %v596 = vlaneseq
        %v597 = vshrl.u32 %v596, 7
        %v598 = vsub.s32 %v595, %v597
        %v599 = vrot.slane %v571, %v598
        %v600 = vcombine.high %v578, %v578
        %v601 = vcombine.high %v585, %v585
        %v602 = vcombine.high %v592, %v592
        %v603 = vcombine.high %v599, %v599
        %v604 = vcombine.high %v396, %v396
        %v606 = vunpack.c.l.s4 1966171168
        %v607 = vunpack.c.0.s8 %v606
        %v608 = vlaneseq
        %v609 = vshrl.u32 %v608, 7
        %v610 = vsub.s32 %v607, %v609
        %v611 = vrot.slane %v396, %v610
        %v613 = vunpack.c.l.s4 1966171168
        %v614 = vunpack.c.0.s8 %v613
        %v615 = vlaneseq
        %v616 = vshrl.u32 %v615, 7
        %v617 = vsub.s32 %v614, %v616
        %v618 = vrot.slane %v604, %v617
        %v619 = vcombine.high %v611, %v611
        %v620 = vcombine.high %v618, %v618
        %v622 = vunpack.c.l.s4 1966171168
        %v623 = vunpack.c.0.s8 %v622
        %v624 = vlaneseq
        %v625 = vshrl.u32 %v624, 7
        %v626 = vsub.s32 %v623, %v625
        %v627 = vrot.slane %v611, %v626
        %v629 = vunpack.c.l.s4 1966171168
        %v630 = vunpack.c.0.s8 %v629
        %v631 = vlaneseq
        %v632 = vshrl.u32 %v631, 7
        %v633 = vsub.s32 %v630, %v632
        %v634 = vrot.slane %v618, %v633
        %v636 = vunpack.c.l.s4 1966171168
        %v637 = vunpack.c.0.s8 %v636
        %v638 = vlaneseq
        %v639 = vshrl.u32 %v638, 7
        %v640 = vsub.s32 %v637, %v639
        %v641 = vrot.slane %v619, %v640
        %v643 = vunpack.c.l.s4 1966171168
        %v644 = vunpack.c.0.s8 %v643
        %v645 = vlaneseq
        %v646 = vshrl.u32 %v645, 7
        %v647 = vsub.s32 %v644, %v646
        %v648 = vrot.slane %v620, %v647
        %v649 = vcombine.high %v627, %v627
        %v650 = vcombine.high %v634, %v634
        %v651 = vcombine.high %v641, %v641
        %v652 = vcombine.high %v648, %v648
        %v653 = vcombine.high %v397, %v397
        %v655 = vunpack.c.l.s4 1966171168
        %v656 = vunpack.c.0.s8 %v655
        %v657 = vlaneseq
        %v658 = vshrl.u32 %v657, 7
        %v659 = vsub.s32 %v656, %v658
        %v660 = vrot.slane %v397, %v659
        %v662 = vunpack.c.l.s4 1966171168
        %v663 = vunpack.c.0.s8 %v662
        %v664 = vlaneseq
        %v665 = vshrl.u32 %v664, 7
        %v666 = vsub.s32 %v663, %v665
        %v667 = vrot.slane %v653, %v666
        %v668 = vcombine.high %v660, %v660
        %v669 = vcombine.high %v667, %v667
        %v671 = vunpack.c.l.s4 1966171168
        %v672 = vunpack.c.0.s8 %v671
        %v673 = vlaneseq
        %v674 = vshrl.u32 %v673, 7
        %v675 = vsub.s32 %v672, %v674
        %v676 = vrot.slane %v660, %v675
        %v678 = vunpack.c.l.s4 1966171168
        %v679 = vunpack.c.0.s8 %v678
        %v680 = vlaneseq
        %v681 = vshrl.u32 %v680, 7
        %v682 = vsub.s32 %v679, %v681
        %v683 = vrot.slane %v667, %v682
        %v685 = vunpack.c.l.s4 1966171168
        %v686 = vunpack.c.0.s8 %v685
        %v687 = vlaneseq
        %v688 = vshrl.u32 %v687, 7
        %v689 = vsub.s32 %v686, %v688
        %v690 = vrot.slane %v668, %v689
        %v692 = vunpack.c.l.s4 1966171168
        %v693 = vunpack.c.0.s8 %v692
        %v694 = vlaneseq
        %v695 = vshrl.u32 %v694, 7
        %v696 = vsub.s32 %v693, %v695
        %v697 = vrot.slane %v669, %v696
        %v698 = vcombine.high %v676, %v676
        %v699 = vcombine.high %v683, %v683
        %v700 = vcombine.high %v690, %v690
        %v701 = vcombine.high %v697, %v697
        %v702 = vcombine.high %v398, %v398
        %v704 = vunpack.c.l.s4 1966171168
        %v705 = vunpack.c.0.s8 %v704
        %v706 = vlaneseq
        %v707 = vshrl.u32 %v706, 7
        %v708 = vsub.s32 %v705, %v707
        %v709 = vrot.slane %v398, %v708
        %v711 = vunpack.c.l.s4 1966171168
        %v712 = vunpack.c.0.s8 %v711
        %v713 = vlaneseq
        %v714 = vshrl.u32 %v713, 7
        %v715 = vsub.s32 %v712, %v714
        %v716 = vrot.slane %v702, %v715
        %v717 = vcombine.high %v709, %v709
        %v718 = vcombine.high %v716, %v716
        %v720 = vunpack.c.l.s4 1966171168
        %v721 = vunpack.c.0.s8 %v720
        %v722 = vlaneseq
        %v723 = vshrl.u32 %v722, 7
        %v724 = vsub.s32 %v721, %v723
        %v725 = vrot.slane %v709, %v724
        %v727 = vunpack.c.l.s4 1966171168
        %v728 = vunpack.c.0.s8 %v727
        %v729 = vlaneseq
        %v730 = vshrl.u32 %v729, 7
        %v731 = vsub.s32 %v728, %v730
        %v732 = vrot.slane %v716, %v731
        %v734 = vunpack.c.l.s4 1966171168
        %v735 = vunpack.c.0.s8 %v734
        %v736 = vlaneseq
        %v737 = vshrl.u32 %v736, 7
        %v738 = vsub.s32 %v735, %v737
        %v739 = vrot.slane %v717, %v738
        %v741 = vunpack.c.l.s4 1966171168
        %v742 = vunpack.c.0.s8 %v741
        %v743 = vlaneseq
        %v744 = vshrl.u32 %v743, 7
        %v745 = vsub.s32 %v742, %v744
        %v746 = vrot.slane %v718, %v745
        %v747 = vcombine.high %v725, %v725
        %v748 = vcombine.high %v732, %v732
        %v749 = vcombine.high %v739, %v739
        %v750 = vcombine.high %v746, %v746
        %v751 = vcombine.high %v399, %v399
        %v753 = vunpack.c.l.s4 1966171168
        %v754 = vunpack.c.0.s8 %v753
        %v755 = vlaneseq
        %v756 = vshrl.u32 %v755, 7
        %v757 = vsub.s32 %v754, %v756
        %v758 = vrot.slane %v399, %v757
        %v760 = vunpack.c.l.s4 1966171168
        %v761 = vunpack.c.0.s8 %v760
        %v762 = vlaneseq
        %v763 = vshrl.u32 %v762, 7
        %v764 = vsub.s32 %v761, %v763
        %v765 = vrot.slane %v751, %v764
        %v766 = vcombine.high %v758, %v758
        %v767 = vcombine.high %v765, %v765
        %v769 = vunpack.c.l.s4 1966171168
        %v770 = vunpack.c.0.s8 %v769
        %v771 = vlaneseq
        %v772 = vshrl.u32 %v771, 7
        %v773 = vsub.s32 %v770, %v772
        %v774 = vrot.slane %v758, %v773
        %v776 = vunpack.c.l.s4 1966171168
        %v777 = vunpack.c.0.s8 %v776
        %v778 = vlaneseq
        %v779 = vshrl.u32 %v778, 7
        %v780 = vsub.s32 %v777, %v779
        %v781 = vrot.slane %v765, %v780
        %v783 = vunpack.c.l.s4 1966171168
        %v784 = vunpack.c.0.s8 %v783
        %v785 = vlaneseq
        %v786 = vshrl.u32 %v785, 7
        %v787 = vsub.s32 %v784, %v786
        %v788 = vrot.slane %v766, %v787
        %v790 = vunpack.c.l.s4 1966171168
        %v791 = vunpack.c.0.s8 %v790
        %v792 = vlaneseq
        %v793 = vshrl.u32 %v792, 7
        %v794 = vsub.s32 %v791, %v793
        %v795 = vrot.slane %v767, %v794
        %v796 = vcombine.high %v774, %v774
        %v797 = vcombine.high %v781, %v781
        %v798 = vcombine.high %v788, %v788
        %v799 = vcombine.high %v795, %v795
        %v800 = vlaneseq
        %v801 = vshrl.u32 %v800, 7
        %v802 = vsub.s32 0, %v801
        %v803 = vrot.slane %v431, %v802
        %v804 = vlaneseq
        %v805 = vshrl.u32 %v804, 7
        %v806 = vsub.s32 0, %v805
        %v807 = vrot.slane %v445, %v806
        %v808 = vlaneseq
        %v809 = vshrl.u32 %v808, 7
        %v810 = vsub.s32 0, %v809
        %v811 = vrot.slane %v453, %v810
        %v812 = vlaneseq
        %v813 = vshrl.u32 %v812, 7
        %v814 = vsub.s32 0, %v813
        %v815 = vrot.slane %v455, %v814
        %v816 = vlaneseq
        %v817 = vshrl.u32 %v816, 7
        %v818 = vsub.s32 0, %v817
        %v819 = vrot.slane %v438, %v818
        %v820 = vlaneseq
        %v821 = vshrl.u32 %v820, 7
        %v822 = vsub.s32 0, %v821
        %v823 = vrot.slane %v452, %v822
        %v824 = vlaneseq
        %v825 = vshrl.u32 %v824, 7
        %v826 = vsub.s32 0, %v825
        %v827 = vrot.slane %v454, %v826
        %v828 = vlaneseq
        %v829 = vshrl.u32 %v828, 7
        %v830 = vsub.s32 0, %v829
        %v831 = vrot.slane %v456, %v830
        %v832 = vlaneseq
        %v833 = vshrl.u32 %v832, 7
        %v834 = vsub.s32 0, %v833
        %v835 = vrot.slane %v480, %v834
        %v836 = vlaneseq
        %v837 = vshrl.u32 %v836, 7
        %v838 = vsub.s32 0, %v837
        %v839 = vrot.slane %v494, %v838
        %v840 = vlaneseq
        %v841 = vshrl.u32 %v840, 7
        %v842 = vsub.s32 0, %v841
        %v843 = vrot.slane %v502, %v842
        %v844 = vlaneseq
        %v845 = vshrl.u32 %v844, 7
        %v846 = vsub.s32 0, %v845
        %v847 = vrot.slane %v504, %v846
        %v848 = vlaneseq
        %v849 = vshrl.u32 %v848, 7
        %v850 = vsub.s32 0, %v849
        %v851 = vrot.slane %v487, %v850
        %v852 = vlaneseq
        %v853 = vshrl.u32 %v852, 7
        %v854 = vsub.s32 0, %v853
        %v855 = vrot.slane %v501, %v854
        %v856 = vlaneseq
        %v857 = vshrl.u32 %v856, 7
        %v858 = vsub.s32 0, %v857
        %v859 = vrot.slane %v503, %v858
        %v860 = vlaneseq
        %v861 = vshrl.u32 %v860, 7
        %v862 = vsub.s32 0, %v861
        %v863 = vrot.slane %v505, %v862
        %v864 = vlaneseq
        %v865 = vshrl.u32 %v864, 7
        %v866 = vsub.s32 0, %v865
        %v867 = vrot.slane %v529, %v866
        %v868 = vlaneseq
        %v869 = vshrl.u32 %v868, 7
        %v870 = vsub.s32 0, %v869
        %v871 = vrot.slane %v543, %v870
        %v872 = vlaneseq
        %v873 = vshrl.u32 %v872, 7
        %v874 = vsub.s32 0, %v873
        %v875 = vrot.slane %v551, %v874
        %v876 = vlaneseq
        %v877 = vshrl.u32 %v876, 7
        %v878 = vsub.s32 0, %v877
        %v879 = vrot.slane %v553, %v878
        %v880 = vlaneseq
        %v881 = vshrl.u32 %v880, 7
        %v882 = vsub.s32 0, %v881
        %v883 = vrot.slane %v536, %v882
        %v884 = vlaneseq
        %v885 = vshrl.u32 %v884, 7
        %v886 = vsub.s32 0, %v885
        %v887 = vrot.slane %v550, %v886
        %v888 = vlaneseq
        %v889 = vshrl.u32 %v888, 7
        %v890 = vsub.s32 0, %v889
        %v891 = vrot.slane %v552, %v890
        %v892 = vlaneseq
        %v893 = vshrl.u32 %v892, 7
        %v894 = vsub.s32 0, %v893
        %v895 = vrot.slane %v554, %v894
        %v896 = vlaneseq
        %v897 = vshrl.u32 %v896, 7
        %v898 = vsub.s32 0, %v897
        %v899 = vrot.slane %v578, %v898
        %v900 = vlaneseq
        %v901 = vshrl.u32 %v900, 7
        %v902 = vsub.s32 0, %v901
        %v903 = vrot.slane %v592, %v902
        %v904 = vlaneseq
        %v905 = vshrl.u32 %v904, 7
        %v906 = vsub.s32 0, %v905
        %v907 = vrot.slane %v600, %v906
        %v908 = vlaneseq
        %v909 = vshrl.u32 %v908, 7
        %v910 = vsub.s32 0, %v909
        %v911 = vrot.slane %v602, %v910
        %v912 = vlaneseq
        %v913 = vshrl.u32 %v912, 7
        %v914 = vsub.s32 0, %v913
        %v915 = vrot.slane %v585, %v914
        %v916 = vlaneseq
        %v917 = vshrl.u32 %v916, 7
        %v918 = vsub.s32 0, %v917
        %v919 = vrot.slane %v599, %v918
        %v920 = vlaneseq
        %v921 = vshrl.u32 %v920, 7
        %v922 = vsub.s32 0, %v921
        %v923 = vrot.slane %v601, %v922
        %v924 = vlaneseq
        %v925 = vshrl.u32 %v924, 7
        %v926 = vsub.s32 0, %v925
        %v927 = vrot.slane %v603, %v926
        %v928 = vlaneseq
        %v929 = vshrl.u32 %v928, 7
        %v930 = vsub.s32 0, %v929
        %v931 = vrot.slane %v627, %v930
        %v932 = vlaneseq
        %v933 = vshrl.u32 %v932, 7
        %v934 = vsub.s32 0, %v933
        %v935 = vrot.slane %v641, %v934
        %v936 = vlaneseq
        %v937 = vshrl.u32 %v936, 7
        %v938 = vsub.s32 0, %v937
        %v939 = vrot.slane %v649, %v938
        %v940 = vlaneseq
        %v941 = vshrl.u32 %v940, 7
        %v942 = vsub.s32 0, %v941
        %v943 = vrot.slane %v651, %v942
        %v944 = vlaneseq
        %v945 = vshrl.u32 %v944, 7
        %v946 = vsub.s32 0, %v945
        %v947 = vrot.slane %v634, %v946
        %v948 = vlaneseq
        %v949 = vshrl.u32 %v948, 7
        %v950 = vsub.s32 0, %v949
        %v951 = vrot.slane %v648, %v950
        %v952 = vlaneseq
        %v953 = vshrl.u32 %v952, 7
        %v954 = vsub.s32 0, %v953
        %v955 = vrot.slane %v650, %v954
        %v956 = vlaneseq
        %v957 = vshrl.u32 %v956, 7
        %v958 = vsub.s32 0, %v957
        %v959 = vrot.slane %v652, %v958
        %v960 = vlaneseq
        %v961 = vshrl.u32 %v960, 7
        %v962 = vsub.s32 0, %v961
        %v963 = vrot.slane %v676, %v962
        %v964 = vlaneseq
        %v965 = vshrl.u32 %v964, 7
        %v966 = vsub.s32 0, %v965
        %v967 = vrot.slane %v690, %v966
        %v968 = vlaneseq
        %v969 = vshrl.u32 %v968, 7
        %v970 = vsub.s32 0, %v969
        %v971 = vrot.slane %v698, %v970
        %v972 = vlaneseq
        %v973 = vshrl.u32 %v972, 7
        %v974 = vsub.s32 0, %v973
        %v975 = vrot.slane %v700, %v974
        %v976 = vlaneseq
        %v977 = vshrl.u32 %v976, 7
        %v978 = vsub.s32 0, %v977
        %v979 = vrot.slane %v683, %v978
        %v980 = vlaneseq
        %v981 = vshrl.u32 %v980, 7
        %v982 = vsub.s32 0, %v981
        %v983 = vrot.slane %v697, %v982
        %v984 = vlaneseq
        %v985 = vshrl.u32 %v984, 7
        %v986 = vsub.s32 0, %v985
        %v987 = vrot.slane %v699, %v986
        %v988 = vlaneseq
        %v989 = vshrl.u32 %v988, 7
        %v990 = vsub.s32 0, %v989
        %v991 = vrot.slane %v701, %v990
        %v992 = vlaneseq
        %v993 = vshrl.u32 %v992, 7
        %v994 = vsub.s32 0, %v993
        %v995 = vrot.slane %v725, %v994
        %v996 = vlaneseq
        %v997 = vshrl.u32 %v996, 7
        %v998 = vsub.s32 0, %v997
        %v999 = vrot.slane %v739, %v998
        %v1000 = vlaneseq
        %v1001 = vshrl.u32 %v1000, 7
        %v1002 = vsub.s32 0, %v1001
        %v1003 = vrot.slane %v747, %v1002
        %v1004 = vlaneseq
        %v1005 = vshrl.u32 %v1004, 7
        %v1006 = vsub.s32 0, %v1005
        %v1007 = vrot.slane %v749, %v1006
        %v1008 = vlaneseq
        %v1009 = vshrl.u32 %v1008, 7
        %v1010 = vsub.s32 0, %v1009
        %v1011 = vrot.slane %v732, %v1010
        %v1012 = vlaneseq
        %v1013 = vshrl.u32 %v1012, 7
        %v1014 = vsub.s32 0, %v1013
        %v1015 = vrot.slane %v746, %v1014
        %v1016 = vlaneseq
        %v1017 = vshrl.u32 %v1016, 7
        %v1018 = vsub.s32 0, %v1017
        %v1019 = vrot.slane %v748, %v1018
        %v1020 = vlaneseq
        %v1021 = vshrl.u32 %v1020, 7
        %v1022 = vsub.s32 0, %v1021
        %v1023 = vrot.slane %v750, %v1022
        %v1024 = vlaneseq
        %v1025 = vshrl.u32 %v1024, 7
        %v1026 = vsub.s32 0, %v1025
        %v1027 = vrot.slane %v774, %v1026
        %v1028 = vlaneseq
        %v1029 = vshrl.u32 %v1028, 7
        %v1030 = vsub.s32 0, %v1029
        %v1031 = vrot.slane %v788, %v1030
        %v1032 = vlaneseq
        %v1033 = vshrl.u32 %v1032, 7
        %v1034 = vsub.s32 0, %v1033
        %v1035 = vrot.slane %v796, %v1034
        %v1036 = vlaneseq
        %v1037 = vshrl.u32 %v1036, 7
        %v1038 = vsub.s32 0, %v1037
        %v1039 = vrot.slane %v798, %v1038
        %v1040 = vlaneseq
        %v1041 = vshrl.u32 %v1040, 7
        %v1042 = vsub.s32 0, %v1041
        %v1043 = vrot.slane %v781, %v1042
        %v1044 = vlaneseq
        %v1045 = vshrl.u32 %v1044, 7
        %v1046 = vsub.s32 0, %v1045
        %v1047 = vrot.slane %v795, %v1046
        %v1048 = vlaneseq
        %v1049 = vshrl.u32 %v1048, 7
        %v1050 = vsub.s32 0, %v1049
        %v1051 = vrot.slane %v797, %v1050
        %v1052 = vlaneseq
        %v1053 = vshrl.u32 %v1052, 7
        %v1054 = vsub.s32 0, %v1053
        %v1055 = vrot.slane %v799, %v1054
        %v1120 = vmul.f32 %v803, %v257
        %v1121 = vmul.f32 %v807, %v257
        %v1122 = vmul.f32 %v811, %v257
        %v1123 = vmul.f32 %v815, %v257
        %v1124 = vmul.f32 %v819, %v257
        %v1125 = vmul.f32 %v823, %v257
        %v1126 = vmul.f32 %v827, %v257
        %v1127 = vmul.f32 %v831, %v257
        %v1128 = vmul.f32 %v835, %v257
        %v1129 = vmul.f32 %v839, %v257
        %v1130 = vmul.f32 %v843, %v257
        %v1131 = vmul.f32 %v847, %v257
        %v1132 = vmul.f32 %v851, %v257
        %v1133 = vmul.f32 %v855, %v257
        %v1134 = vmul.f32 %v859, %v257
        %v1135 = vmul.f32 %v863, %v257
        %v1136 = vmul.f32 %v867, %v257
        %v1137 = vmul.f32 %v871, %v257
        %v1138 = vmul.f32 %v875, %v257
        %v1139 = vmul.f32 %v879, %v257
        %v1140 = vmul.f32 %v883, %v257
        %v1141 = vmul.f32 %v887, %v257
        %v1142 = vmul.f32 %v891, %v257
        %v1143 = vmul.f32 %v895, %v257
        %v1144 = vmul.f32 %v899, %v257
        %v1145 = vmul.f32 %v903, %v257
        %v1146 = vmul.f32 %v907, %v257
        %v1147 = vmul.f32 %v911, %v257
        %v1148 = vmul.f32 %v915, %v257
        %v1149 = vmul.f32 %v919, %v257
        %v1150 = vmul.f32 %v923, %v257
        %v1151 = vmul.f32 %v927, %v257
        %v1152 = vmul.f32 %v931, %v257
        %v1153 = vmul.f32 %v935, %v257
        %v1154 = vmul.f32 %v939, %v257
        %v1155 = vmul.f32 %v943, %v257
        %v1156 = vmul.f32 %v947, %v257
        %v1157 = vmul.f32 %v951, %v257
        %v1158 = vmul.f32 %v955, %v257
        %v1159 = vmul.f32 %v959, %v257
        %v1160 = vmul.f32 %v963, %v257
        %v1161 = vmul.f32 %v967, %v257
        %v1162 = vmul.f32 %v971, %v257
        %v1163 = vmul.f32 %v975, %v257
        %v1164 = vmul.f32 %v979, %v257
        %v1165 = vmul.f32 %v983, %v257
        %v1166 = vmul.f32 %v987, %v257
        %v1167 = vmul.f32 %v991, %v257
        %v1168 = vmul.f32 %v995, %v257
        %v1169 = vmul.f32 %v999, %v257
        %v1170 = vmul.f32 %v1003, %v257
        %v1171 = vmul.f32 %v1007, %v257
        %v1172 = vmul.f32 %v1011, %v257
        %v1173 = vmul.f32 %v1015, %v257
        %v1174 = vmul.f32 %v1019, %v257
        %v1175 = vmul.f32 %v1023, %v257
        %v1176 = vmul.f32 %v1027, %v257
        %v1177 = vmul.f32 %v1031, %v257
        %v1178 = vmul.f32 %v1035, %v257
        %v1179 = vmul.f32 %v1039, %v257
        %v1180 = vmul.f32 %v1043, %v257
        %v1181 = vmul.f32 %v1047, %v257
        %v1182 = vmul.f32 %v1051, %v257
        %v1183 = vmul.f32 %v1055, %v257
        %v1184 = vld [vmem:[%s178] sm:$0xff]
        %v1185 = vld [vmem:[%s178 + $0x8] sm:$0xff]
        %v1188 = vcombine.high %v1184, %v1184
        %v1189 = vcombine.high %v1185, %v1185
        %1192 = vmatprep.subr.mxu0 0.0
        %1193 = vmatpush1.msra.mxu0 %v1120
        %1194 = vmatprep.subr.mxu0 0.0
        %1195 = vmatpush1.msra.mxu0 %v1121
        %1196 = vmatprep.subr.mxu0 0.0
        %1197 = vmatpush1.msra.mxu0 %v1122
        %1198 = vmatprep.subr.mxu0 0.0
        %1199 = vmatpush1.msra.mxu0 %v1123
        %1200 = vmatprep.subr.mxu0 0.0
        %1201 = vmatpush1.msra.mxu0 %v1124
        %1202 = vmatprep.subr.mxu0 0.0
        %1203 = vmatpush1.msra.mxu0 %v1125
        %1204 = vmatprep.subr.mxu0 0.0
        %1205 = vmatpush1.msra.mxu0 %v1126
        %1206 = vmatprep.subr.mxu0 0.0
        %1207 = vmatpush1.msra.mxu0 %v1127
        %1208 = vmatprep.subr.mxu0 0.0
        %1209 = vmatpush1.msra.mxu0 %v1128
        %1210 = vmatprep.subr.mxu0 0.0
        %1211 = vmatpush1.msra.mxu0 %v1129
        %1212 = vmatprep.subr.mxu0 0.0
        %1213 = vmatpush1.msra.mxu0 %v1130
        %1214 = vmatprep.subr.mxu0 0.0
        %1215 = vmatpush1.msra.mxu0 %v1131
        %1216 = vmatprep.subr.mxu0 0.0
        %1217 = vmatpush1.msra.mxu0 %v1132
        %1218 = vmatprep.subr.mxu0 0.0
        %1219 = vmatpush1.msra.mxu0 %v1133
        %1220 = vmatprep.subr.mxu0 0.0
        %1221 = vmatpush1.msra.mxu0 %v1134
        %1222 = vmatprep.subr.mxu0 0.0
        %1223 = vmatpush1.msra.mxu0 %v1135
        %1224 = vmatprep.subr.mxu0 0.0
        %1225 = vmatpush1.msra.mxu0 %v1136
        %1226 = vmatprep.subr.mxu0 0.0
        %1227 = vmatpush1.msra.mxu0 %v1137
        %1228 = vmatprep.subr.mxu0 0.0
        %1229 = vmatpush1.msra.mxu0 %v1138
        %1230 = vmatprep.subr.mxu0 0.0
        %1231 = vmatpush1.msra.mxu0 %v1139
        %1232 = vmatprep.subr.mxu0 0.0
        %1233 = vmatpush1.msra.mxu0 %v1140
        %1234 = vmatprep.subr.mxu0 0.0
        %1235 = vmatpush1.msra.mxu0 %v1141
        %1236 = vmatprep.subr.mxu0 0.0
        %1237 = vmatpush1.msra.mxu0 %v1142
        %1238 = vmatprep.subr.mxu0 0.0
        %1239 = vmatpush1.msra.mxu0 %v1143
        %1240 = vmatprep.subr.mxu0 0.0
        %1241 = vmatpush1.msra.mxu0 %v1144
        %1242 = vmatprep.subr.mxu0 0.0
        %1243 = vmatpush1.msra.mxu0 %v1145
        %1244 = vmatprep.subr.mxu0 0.0
        %1245 = vmatpush1.msra.mxu0 %v1146
        %1246 = vmatprep.subr.mxu0 0.0
        %1247 = vmatpush1.msra.mxu0 %v1147
        %1248 = vmatprep.subr.mxu0 0.0
        %1249 = vmatpush1.msra.mxu0 %v1148
        %1250 = vmatprep.subr.mxu0 0.0
        %1251 = vmatpush1.msra.mxu0 %v1149
        %1252 = vmatprep.subr.mxu0 0.0
        %1253 = vmatpush1.msra.mxu0 %v1150
        %1254 = vmatprep.subr.mxu0 0.0
        %1255 = vmatpush1.msra.mxu0 %v1151
        %1256 = vmatprep.mubr.f32.mxu0 %v1188
        %1257 = vmatmul.mubr.f32.gmra.mrb[0].mxu0 %v1184
        %v1258 = vpop.f32.mrb[0].mxu0
        %v1259 = vadd.f32 0.0, %v1258
        %v1260 = vpop.f32.mrb[0].mxu0
        %1261 = vdwg.mxu0
        %1262 = vmatprep.subr.mxu0 0.0
        %1263 = vmatpush1.msra.mxu0 %v1152
        %1264 = vmatprep.subr.mxu0 0.0
        %1265 = vmatpush1.msra.mxu0 %v1153
        %1266 = vmatprep.subr.mxu0 0.0
        %1267 = vmatpush1.msra.mxu0 %v1154
        %1268 = vmatprep.subr.mxu0 0.0
        %1269 = vmatpush1.msra.mxu0 %v1155
        %1270 = vmatprep.subr.mxu0 0.0
        %1271 = vmatpush1.msra.mxu0 %v1156
        %1272 = vmatprep.subr.mxu0 0.0
        %1273 = vmatpush1.msra.mxu0 %v1157
        %1274 = vmatprep.subr.mxu0 0.0
        %1275 = vmatpush1.msra.mxu0 %v1158
        %1276 = vmatprep.subr.mxu0 0.0
        %1277 = vmatpush1.msra.mxu0 %v1159
        %1278 = vmatprep.subr.mxu0 0.0
        %1279 = vmatpush1.msra.mxu0 %v1160
        %1280 = vmatprep.subr.mxu0 0.0
        %1281 = vmatpush1.msra.mxu0 %v1161
        %1282 = vmatprep.subr.mxu0 0.0
        %1283 = vmatpush1.msra.mxu0 %v1162
        %1284 = vmatprep.subr.mxu0 0.0
        %1285 = vmatpush1.msra.mxu0 %v1163
        %1286 = vmatprep.subr.mxu0 0.0
        %1287 = vmatpush1.msra.mxu0 %v1164
        %1288 = vmatprep.subr.mxu0 0.0
        %1289 = vmatpush1.msra.mxu0 %v1165
        %1290 = vmatprep.subr.mxu0 0.0
        %1291 = vmatpush1.msra.mxu0 %v1166
        %1292 = vmatprep.subr.mxu0 0.0
        %1293 = vmatpush1.msra.mxu0 %v1167
        %1294 = vmatprep.subr.mxu0 0.0
        %1295 = vmatpush1.msra.mxu0 %v1168
        %1296 = vmatprep.subr.mxu0 0.0
        %1297 = vmatpush1.msra.mxu0 %v1169
        %1298 = vmatprep.subr.mxu0 0.0
        %1299 = vmatpush1.msra.mxu0 %v1170
        %1300 = vmatprep.subr.mxu0 0.0
        %1301 = vmatpush1.msra.mxu0 %v1171
        %1302 = vmatprep.subr.mxu0 0.0
        %1303 = vmatpush1.msra.mxu0 %v1172
        %1304 = vmatprep.subr.mxu0 0.0
        %1305 = vmatpush1.msra.mxu0 %v1173
        %1306 = vmatprep.subr.mxu0 0.0
        %1307 = vmatpush1.msra.mxu0 %v1174
        %1308 = vmatprep.subr.mxu0 0.0
        %1309 = vmatpush1.msra.mxu0 %v1175
        %1310 = vmatprep.subr.mxu0 0.0
        %1311 = vmatpush1.msra.mxu0 %v1176
        %1312 = vmatprep.subr.mxu0 0.0
        %1313 = vmatpush1.msra.mxu0 %v1177
        %1314 = vmatprep.subr.mxu0 0.0
        %1315 = vmatpush1.msra.mxu0 %v1178
        %1316 = vmatprep.subr.mxu0 0.0
        %1317 = vmatpush1.msra.mxu0 %v1179
        %1318 = vmatprep.subr.mxu0 0.0
        %1319 = vmatpush1.msra.mxu0 %v1180
        %1320 = vmatprep.subr.mxu0 0.0
        %1321 = vmatpush1.msra.mxu0 %v1181
        %1322 = vmatprep.subr.mxu0 0.0
        %1323 = vmatpush1.msra.mxu0 %v1182
        %1324 = vmatprep.subr.mxu0 0.0
        %1325 = vmatpush1.msra.mxu0 %v1183
        %1326 = vmatprep.mubr.f32.mxu0 %v1189
        %1327 = vmatmul.mubr.f32.gmra.mrb[0].mxu0 %v1185
        %v1328 = vpop.f32.mrb[0].mxu0
        %v1329 = vadd.f32 %v1259, %v1328
        %v1330 = vpop.f32.mrb[0].mxu0
        %1331 = vdwg.mxu0
        %p1332 = scmp.eq.s32.totalorder %s26, 0
        // Predicated region
        $region33: #{tpu_custom_call.1} parent=27 // pred_check
          %p1333 = pneg %p1332
        $region34: #{tpu_custom_call.1} parent=27 // pred_check_branch
          %1335 = sbr.rel (%p1333) target = $region36
        $region35: #{tpu_custom_call.1} parent=27 // pred_region
          %1336 = vst [vmem:[%s205] sm:$0xf] 0.0
        $region36: #{tpu_custom_call.1} parent=27 // pred_fallthru
          _
        %v1337 = vld [vmem:[%s205] sm:$0xf]
        %v1338 = vadd.f32 %v1337, %v1329
        %1339 = vst [vmem:[%s205] sm:$0xf] %v1338
        %s1340 = sand.u32 %s104, 1
        %s1341 = scalar_lea.sflag [#allocation4], %s1340
        %s1342 = sand.u32 %s104, 1
        %s1343 = smul.addr %s1342, 4
        %s1344 = scalar_lea.vmem [#allocation5], %s1343
        // Predicated region
        $region37: #{tpu_custom_call.1} parent=27 // pred_check
          %p1345 = pneg %p114
        $region38: #{tpu_custom_call.1} parent=27 // pred_check_branch
          %1347 = sbr.rel (%p1345) target = $region40
        $region39: #{tpu_custom_call.1} parent=27 // pred_region
          %s1349 = ssub.s32 64, 64
          %1350 = vsyncadd %s1341, %s1349
          %s1351 = sadd.s32 %s25, %s24
          %s1352 = smul.addr %s1351, 64
          %s1353 = scalar_lea.hbm %s2, %s1352
          %s1355 = sshll.u32 %s1344, 4
          %s1356 = int_to_ptr.vmem [resolvable:$true] %s1355
          %1358 = dma.vmem_to_hbm [thread:$0]  %s1356, 64, %s1353, %s1341
        $region40: #{tpu_custom_call.1} parent=27 // pred_fallthru
          _
      $region28: #{tpu_custom_call.1} parent=5 // pred_fallthru
        _
      %p1359 = scmp.le.s32.totalorder 2, %s14
      // Predicated region
      $region41: #{tpu_custom_call.1} parent=5 // pred_check
        %p1360 = pneg %p1359
      $region42: #{tpu_custom_call.1} parent=5 // pred_check_branch
        %1362 = sbr.rel (%p1360) target = $region44
      $region43: #{tpu_custom_call.1} parent=5 // pred_region
        %s1363 = ssub.s32 %s14, 2
        // Predicated region
        $region45: #{tpu_custom_call.1} parent=43 // pred_check
          %p1364 = pneg %p120
        $region46: #{tpu_custom_call.1} parent=43 // pred_check_branch
          %1366 = sbr.rel (%p1364) target = $region48
        $region47: #{tpu_custom_call.1} parent=43 // pred_region
          %s1367 = sand.u32 %s105, 1
          %s1368 = scalar_lea.sflag [#allocation4], %s1367
          %s1369 = sand.u32 %s105, 1
          %s1370 = smul.addr %s1369, 4
          %s1371 = scalar_lea.vmem [#allocation5], %s1370
          %1372 = dma.done %s1368, 64
        $region48: #{tpu_custom_call.1} parent=43 // pred_fallthru
          _
      $region44: #{tpu_custom_call.1} parent=5 // pred_fallthru
        _
    $region6: #{tpu_custom_call.1} parent=1 // loop_footer
      %s18 = sadd.s32 1, %s14
    $region7: #{tpu_custom_call.1} parent=1 // loop_footer_branch
      %13 = sbr.rel target = $region3
    $region8: #{tpu_custom_call.1} parent=1 // loop_exit
      _
    %1373 = vsyncpa [#allocation3], 1
    %s1374 = scalar_lea.sflag [#allocation3], 1
    %1375 = vsyncpa %s1374, 1
    %1376 = vsyncpa [#allocation4], 1
    %s1377 = scalar_lea.sflag [#allocation4], 1
    %1378 = vsyncpa %s1377, 1

</llo_original>
